<compile_context>
chip_gen: v7x
topology: tpu7x:2x2x1
jax: 0.10.0
libtpu: 0.0.40
codegen_flags: <defaults>
</compile_context>

<pallas_src>
import functools

import jax
import jax.numpy as jnp
from jax.experimental import pallas as pl
from jax.experimental.pallas import tpu as pltpu

LANE = 128
SUBLANE = 8
MAX_TILE_ROWS = 8192       # 8192 x 128 f32 = 4 MiB per stream per pipeline buffer


def _num_core_splits():
    """2-way grid split only on chips with two TensorCores (v7x); 1 elsewhere."""
    # TODO(synk): on v7x, verify in the Mosaic dump that the leading "parallel"
    # axis really shards across both TensorCores; if not, switch that axis to
    # pltpu.CORE_PARALLEL (or pl.core_map with create_tensorcore_mesh).
    try:
        kind = jax.devices()[0].device_kind.lower()
    except Exception:
        return 1
    return 2 if ("v7" in kind or "7x" in kind) else 1


def _mixed_loss_kernel(x_ref, t_ref, out_ref, *, gamma, n_valid,
                       steps_per_core, binary_fast_path):
    """Accumulates four (8,128) partial-sum tiles into out_ref (shape (4,8,128)):

      out_ref[0] : sum of focal elementwise loss
      out_ref[1] : sum of sigmoid(x) * target   (dice intersection)
      out_ref[2] : sum of sigmoid(x)            (dice denominator part)
      out_ref[3] : sum of target                (dice denominator part)
    """
    c = pl.program_id(0)     # core-split index  ("parallel" axis)
    i = pl.program_id(1)     # row-tile index within this core ("arbitrary" axis)

    @pl.when(i == 0)
    def _():
        out_ref[...] = jnp.zeros_like(out_ref)

    tile_rows, lane = x_ref.shape

    # Static (trace-time) row bookkeeping.  All runtime validity comparisons
    # are in row units so nothing overflows int32 even for huge inputs.
    n_full_rows = n_valid // LANE          # rows that are entirely valid
    n_rem = n_valid % LANE                 # valid lanes in the last partial row
    rows_ceil = pl.cdiv(n_valid, LANE)     # total rows holding any valid data

    g = c * steps_per_core + i             # global (unclamped) tile index
    row0 = g * tile_rows                   # first row this tile covers

    def quantities(x, t):
        # softplus(-x) = max(-x, 0) + log1p(exp(-|x|)); reused for bce & sigmoid.
        e = jnp.exp(-jnp.abs(x))
        sp_neg = jnp.maximum(-x, 0.0) + jnp.log1p(e)
        # PyTorch: x - x*t + max_val + log(exp(-max_val) + exp(-x - max_val))
        bce = x - x * t + sp_neg
        # sigmoid(x) = 1/(1+exp(-x)) expressed via the already-computed
        # exp(-|x|) plus one reciprocal (no second exp on the EUP).
        # (pl.reciprocal(approx=True) is available if tolerance allows.)
        r = pl.reciprocal(1.0 + e, approx=False)
        sig = jnp.where(x >= 0.0, r, e * r)
        if binary_fast_path:
            # For t in {0,1}: sigmoid(-x*(2t-1)) = sig + t*(1 - 2*sig), and
            # exp(gamma * logsigmoid(.)) == p**gamma for integer gamma (pure VPU).
            p = sig + t * (1.0 - 2.0 * sig)
            w = p
            for _ in range(int(gamma) - 1):
                w = w * p
        else:
            # General stable path (soft labels / non-integer gamma).
            z = -x * (t * 2.0 - 1.0)
            invprobs = jnp.minimum(z, 0.0) - jnp.log1p(jnp.exp(-jnp.abs(z)))
            w = jnp.exp(invprobs * gamma)
        return w * bce, sig * t, sig, t

    def accumulate(valid):
        x = x_ref[...].astype(jnp.float32)
        t = t_ref[...].astype(jnp.float32)          # upcast narrow targets here
        focal, sig_t, sig, tgt = quantities(x, t)
        if valid is not None:
            focal = jnp.where(valid, focal, 0.0)
            sig_t = jnp.where(valid, sig_t, 0.0)
            sig = jnp.where(valid, sig, 0.0)
            tgt = jnp.where(valid, tgt, 0.0)

        if tile_rows % SUBLANE == 0:
            def fold(q):   # (tile_rows,128) -> (8,128) partials (VPU adds only)
                return jnp.sum(q.reshape(tile_rows // SUBLANE, SUBLANE, lane),
                               axis=0)
        else:
            # Ragged single-tile case (rows not a multiple of 8): reduce to one
            # row and place it on sublane 0 of the (8,128) accumulator.
            def fold(q):
                s = jnp.sum(q, axis=0, keepdims=True)
                return jnp.concatenate(
                    [s, jnp.zeros((SUBLANE - 1, lane), jnp.float32)], axis=0)

        out_ref[0] += fold(focal)
        out_ref[1] += fold(sig_t)
        out_ref[2] += fold(sig)
        out_ref[3] += fold(tgt)

    fully_valid = (row0 + tile_rows) <= n_full_rows
    partially_valid = jnp.logical_and(row0 < rows_ceil,
                                      jnp.logical_not(fully_valid))

    @pl.when(fully_valid)
    def _():
        accumulate(None)

    @pl.when(partially_valid)
    def _():
        rows_idx = jax.lax.broadcasted_iota(jnp.int32, (tile_rows, lane), 0)
        cols_idx = jax.lax.broadcasted_iota(jnp.int32, (tile_rows, lane), 1)
        grow = row0 + rows_idx
        valid = jnp.logical_or(
            grow < n_full_rows,
            jnp.logical_and(grow == n_full_rows, cols_idx < n_rem))
        accumulate(valid)
    # Tiles entirely past n_valid (clamped index_map duplicates / padding-only
    # tiles) skip all compute.


def mixed_loss(x, target, *, alpha=10.0, gamma=2.0, binary_targets=True):
    """JAX/Pallas equivalent of MixedLoss(alpha, gamma).forward(x, target).

    `target` may be supplied in a narrow dtype (int8 / bool / bfloat16) to cut
    HBM traffic; it is upcast to float32 inside the kernel.  Set
    `binary_targets=False` for soft labels (uses the general logsigmoid path).
    """
    n = int(x.size)
    xf = jnp.reshape(x, (-1,))
    tf = jnp.reshape(target, (-1,))

    # Pad only when n is not lane-aligned; the in-kernel n_valid mask handles
    # the tail, so lane-aligned inputs (the common case) skip the pad pass.
    # TODO(synk): for the full end-to-end win, produce logits/targets in a
    # (rows, 128) lane-dense layout upstream so this flatten/reshape fuses away.
    n_pad = pl.cdiv(n, LANE) * LANE
    if n_pad != n:
        xf = jnp.pad(xf, (0, n_pad - n))
        tf = jnp.pad(tf, (0, n_pad - n))

    rows = n_pad // LANE
    xr = xf.reshape(rows, LANE)
    tr = tf.reshape(rows, LANE)

    tile_rows = min(MAX_TILE_ROWS, rows)
    tiles_total = pl.cdiv(rows, tile_rows)
    core_splits = _num_core_splits() if tiles_total >= 2 else 1
    steps_per_core = pl.cdiv(tiles_total, core_splits)

    binary_fast_path = (bool(binary_targets)
                        and float(gamma) >= 1.0 and float(gamma).is_integer())

    kernel = functools.partial(
        _mixed_loss_kernel, gamma=float(gamma), n_valid=n,
        steps_per_core=steps_per_core, binary_fast_path=binary_fast_path)

    # Tiles past the end of the slab are clamped onto the last real tile (keeps
    # the DMA in bounds); their contributions are skipped entirely in-kernel.
    def row_tile_map(c, i):
        return (jnp.minimum(c * steps_per_core + i, tiles_total - 1), 0)

    in_spec = pl.BlockSpec((tile_rows, LANE), row_tile_map)
    out_spec = pl.BlockSpec((4, SUBLANE, LANE), lambda c, i: (c, 0, 0))

    partials = pl.pallas_call(
        kernel,
        out_shape=jax.ShapeDtypeStruct((core_splits * 4, SUBLANE, LANE),
                                       jnp.float32),
        grid=(core_splits, steps_per_core),
        in_specs=[in_spec, in_spec],
        out_specs=out_spec,
        compiler_params=pltpu.CompilerParams(
            dimension_semantics=("parallel", "arbitrary"),
            vmem_limit_bytes=32 * 1024 * 1024),
    )(xr, tr)

    sums = jnp.sum(partials.reshape(core_splits, 4, SUBLANE, LANE),
                   axis=(0, 2, 3))
    focal_sum, intersection, sig_sum, t_sum = sums[0], sums[1], sums[2], sums[3]

    focal_mean = focal_sum / jnp.float32(n)
    smooth = jnp.float32(1.0)
    dice = (2.0 * intersection + smooth) / (sig_sum + t_sum + smooth)
    loss = alpha * focal_mean - jnp.log(dice)
    return loss   # scalar; torch's final .mean() is a no-op here


def _reference_mixed_loss(x, t, alpha=10.0, gamma=2.0):
    x = x.astype(jnp.float32).reshape(-1)
    t = t.astype(jnp.float32).reshape(-1)
    max_val = jnp.maximum(-x, 0.0)
    bce = x - x * t + max_val + jnp.log(jnp.exp(-max_val) + jnp.exp(-x - max_val))
    invprobs = jax.nn.log_sigmoid(-x * (t * 2.0 - 1.0))
    focal = jnp.mean(jnp.exp(invprobs * gamma) * bce)
    sig = jax.nn.sigmoid(x)
    dice = (2.0 * jnp.sum(sig * t) + 1.0) / (jnp.sum(sig) + jnp.sum(t) + 1.0)
    return alpha * focal - jnp.log(dice)


if __name__ == "__main__":
    key = jax.random.PRNGKey(0)
    kx, kt, kx2, kt2 = jax.random.split(key, 4)

    alpha, gamma = 10.0, 2.0

    # NCHW-shaped logits and binary mask target, as the segmentation loss expects.
    x = jax.random.normal(kx, (2, 4, 16, 16), dtype=jnp.float32)
    target = (jax.random.uniform(kt, (2, 4, 16, 16)) > 0.5).astype(jnp.float32)

    ref = _reference_mixed_loss(x, target, alpha=alpha, gamma=gamma)

    out = jax.block_until_ready(mixed_loss(x, target, alpha=alpha, gamma=gamma))
    assert jnp.allclose(out, ref, rtol=1e-5, atol=1e-5), (out, ref)

    # Narrow-dtype target stream (int8): the preferred low-HBM-traffic path.
    out_i8 = jax.block_until_ready(
        mixed_loss(x, target.astype(jnp.int8), alpha=alpha, gamma=gamma))
    assert jnp.allclose(out_i8, ref, rtol=1e-5, atol=1e-5), (out_i8, ref)

    # Non-lane-aligned shape: exercises the padded, masked-tail + ragged-fold path.
    x2 = jax.random.normal(kx2, (2, 1, 17, 23), dtype=jnp.float32)
    t2 = (jax.random.uniform(kt2, (2, 1, 17, 23)) > 0.5).astype(jnp.float32)
    out2 = jax.block_until_ready(mixed_loss(x2, t2, alpha=alpha, gamma=gamma))
    ref2 = _reference_mixed_loss(x2, t2, alpha=alpha, gamma=gamma)
    assert jnp.allclose(out2, ref2, rtol=1e-5, atol=1e-5), (out2, ref2)

    print("KERNEL_OK")
</pallas_src>

<mosaic_0001>
module attributes {stable_mosaic.version = 11 : i64} {
  func.func @_mixed_loss_kernel(%arg0: i32, %arg1: i32, %arg2: memref<16x128xf32, #tpu.memory_space<vmem>>, %arg3: memref<16x128xf32, #tpu.memory_space<vmem>>, %arg4: memref<4x8x128xf32, #tpu.memory_space<vmem>>) attributes {dimension_semantics = [#tpu.dimension_semantics<parallel>, #tpu.dimension_semantics<arbitrary>], iteration_bounds = array<i64: 1, 1>, scalar_prefetch = 0 : i64, scratch_operands = 0 : i64, tpu.core_type = #tpu.core_type<tc>, window_params = [{transform_indices = @transform_0, window_bounds = array<i64: 16, 128>}, {transform_indices = @transform_1, window_bounds = array<i64: 16, 128>}, {transform_indices = @transform_2, window_bounds = array<i64: 4, 8, 128>}]} {
    %c0_i32 = arith.constant 0 : i32
    %0 = arith.cmpi eq, %arg1, %c0_i32 : i32
    %1 = arith.extui %0 : i1 to i32
    %c0_i32_0 = arith.constant 0 : i32
    %2 = arith.cmpi ne, %1, %c0_i32_0 : i32
    scf.if %2 {
      %cst = arith.constant 0.000000e+00 : f32
      %15 = vector.broadcast %cst : f32 to vector<4x8x128xf32>
      %c0 = arith.constant 0 : index
      %c0_6 = arith.constant 0 : index
      %c0_7 = arith.constant 0 : index
      %16 = vector.load %arg4[%c0, %c0_6, %c0_7] : memref<4x8x128xf32, #tpu.memory_space<vmem>>, vector<4x8x128xf32>
      tpu.vector_store %arg4[%c0, %c0_6, %c0_7], %15 {strides = array<i32>} : memref<4x8x128xf32, #tpu.memory_space<vmem>>, vector<4x8x128xf32>,
    } else {
    }
    %c1_i32 = arith.constant 1 : i32
    %3 = arith.muli %arg0, %c1_i32 : i32
    %4 = arith.addi %3, %arg1 : i32
    %c16_i32 = arith.constant 16 : i32
    %5 = arith.muli %4, %c16_i32 : i32
    %c16_i32_1 = arith.constant 16 : i32
    %6 = arith.addi %5, %c16_i32_1 : i32
    %c16_i32_2 = arith.constant 16 : i32
    %7 = arith.cmpi sle, %6, %c16_i32_2 : i32
    %c16_i32_3 = arith.constant 16 : i32
    %8 = arith.cmpi slt, %5, %c16_i32_3 : i32
    %true = arith.constant true
    %9 = arith.xori %7, %true : i1
    %10 = arith.andi %8, %9 : i1
    %11 = arith.extui %7 : i1 to i32
    %c0_i32_4 = arith.constant 0 : i32
    %12 = arith.cmpi ne, %11, %c0_i32_4 : i32
    scf.if %12 {
      %c0 = arith.constant 0 : index
      %c0_6 = arith.constant 0 : index
      %15 = vector.load %arg2[%c0, %c0_6] : memref<16x128xf32, #tpu.memory_space<vmem>>, vector<16x128xf32>
      %c0_7 = arith.constant 0 : index
      %c0_8 = arith.constant 0 : index
      %16 = vector.load %arg3[%c0_7, %c0_8] : memref<16x128xf32, #tpu.memory_space<vmem>>, vector<16x128xf32>
      %17 = math.absf %15 : vector<16x128xf32>
      %cst = arith.constant 0.000000e+00 : f32
      %18 = vector.broadcast %cst : f32 to vector<16x128xf32>
      %19 = arith.subf %18, %17 : vector<16x128xf32>
      %20 = math.exp %19 : vector<16x128xf32>
      %cst_9 = arith.constant 0.000000e+00 : f32
      %21 = vector.broadcast %cst_9 : f32 to vector<16x128xf32>
      %22 = arith.subf %21, %15 : vector<16x128xf32>
      %cst_10 = arith.constant 0.000000e+00 : f32
      %23 = vector.broadcast %cst_10 : f32 to vector<16x128xf32>
      %24 = arith.maximumf %22, %23 : vector<16x128xf32>
      %25 = math.log1p %20 : vector<16x128xf32>
      %26 = arith.addf %24, %25 : vector<16x128xf32>
      %27 = arith.mulf %15, %16 : vector<16x128xf32>
      %28 = arith.subf %15, %27 : vector<16x128xf32>
      %29 = arith.addf %28, %26 : vector<16x128xf32>
      %cst_11 = arith.constant 1.000000e+00 : f32
      %30 = vector.broadcast %cst_11 : f32 to vector<16x128xf32>
      %31 = arith.addf %30, %20 : vector<16x128xf32>
      %32 = tpu.reciprocal %31 : vector<16x128xf32> -> vector<16x128xf32>
      %cst_12 = arith.constant 0.000000e+00 : f32
      %33 = vector.broadcast %cst_12 : f32 to vector<16x128xf32>
      %34 = arith.cmpf oge, %15, %33 : vector<16x128xf32>
      %35 = arith.mulf %20, %32 : vector<16x128xf32>
      %36 = arith.select %34, %32, %35 : vector<16x128xi1>, vector<16x128xf32>
      %cst_13 = arith.constant 2.000000e+00 : f32
      %37 = vector.broadcast %cst_13 : f32 to vector<16x128xf32>
      %38 = arith.mulf %37, %36 : vector<16x128xf32>
      %cst_14 = arith.constant 1.000000e+00 : f32
      %39 = vector.broadcast %cst_14 : f32 to vector<16x128xf32>
      %40 = arith.subf %39, %38 : vector<16x128xf32>
      %41 = arith.mulf %16, %40 : vector<16x128xf32>
      %42 = arith.addf %36, %41 : vector<16x128xf32>
      %43 = arith.mulf %42, %42 : vector<16x128xf32>
      %44 = arith.mulf %43, %29 : vector<16x128xf32>
      %45 = arith.mulf %36, %16 : vector<16x128xf32>
      %c0_15 = arith.constant 0 : index
      %c0_16 = arith.constant 0 : index
      %c0_17 = arith.constant 0 : index
      %46 = vector.load %arg4[%c0_15, %c0_16, %c0_17] : memref<4x8x128xf32, #tpu.memory_space<vmem>>, vector<1x8x128xf32>
      %47 = vector.shape_cast %46 : vector<1x8x128xf32> to vector<8x128xf32>
      %48 = vector.shape_cast %44 : vector<16x128xf32> to vector<2x8x128xf32>
      %cst_18 = arith.constant dense<0.000000e+00> : vector<8x128xf32>
      %49 = vector.multi_reduction <add>, %48, %cst_18 [0] : vector<2x8x128xf32> to vector<8x128xf32>
      %50 = arith.addf %47, %49 : vector<8x128xf32>
      %c0_19 = arith.constant 0 : index
      %c0_20 = arith.constant 0 : index
      %c0_21 = arith.constant 0 : index
      %51 = vector.load %arg4[%c0_19, %c0_20, %c0_21] : memref<4x8x128xf32, #tpu.memory_space<vmem>>, vector<1x8x128xf32>
      %52 = vector.shape_cast %51 : vector<1x8x128xf32> to vector<8x128xf32>
      %53 = vector.shape_cast %50 : vector<8x128xf32> to vector<1x8x128xf32>
      tpu.vector_store %arg4[%c0_19, %c0_20, %c0_21], %53 {strides = array<i32>} : memref<4x8x128xf32, #tpu.memory_space<vmem>>, vector<1x8x128xf32>,
      %c1 = arith.constant 1 : index
      %c0_22 = arith.constant 0 : index
      %c0_23 = arith.constant 0 : index
      %54 = vector.load %arg4[%c1, %c0_22, %c0_23] : memref<4x8x128xf32, #tpu.memory_space<vmem>>, vector<1x8x128xf32>
      %55 = vector.shape_cast %54 : vector<1x8x128xf32> to vector<8x128xf32>
      %56 = vector.shape_cast %45 : vector<16x128xf32> to vector<2x8x128xf32>
      %cst_24 = arith.constant dense<0.000000e+00> : vector<8x128xf32>
      %57 = vector.multi_reduction <add>, %56, %cst_24 [0] : vector<2x8x128xf32> to vector<8x128xf32>
      %58 = arith.addf %55, %57 : vector<8x128xf32>
      %c1_25 = arith.constant 1 : index
      %c0_26 = arith.constant 0 : index
      %c0_27 = arith.constant 0 : index
      %59 = vector.load %arg4[%c1_25, %c0_26, %c0_27] : memref<4x8x128xf32, #tpu.memory_space<vmem>>, vector<1x8x128xf32>
      %60 = vector.shape_cast %59 : vector<1x8x128xf32> to vector<8x128xf32>
      %61 = vector.shape_cast %58 : vector<8x128xf32> to vector<1x8x128xf32>
      tpu.vector_store %arg4[%c1_25, %c0_26, %c0_27], %61 {strides = array<i32>} : memref<4x8x128xf32, #tpu.memory_space<vmem>>, vector<1x8x128xf32>,
      %c2 = arith.constant 2 : index
      %c0_28 = arith.constant 0 : index
      %c0_29 = arith.constant 0 : index
      %62 = vector.load %arg4[%c2, %c0_28, %c0_29] : memref<4x8x128xf32, #tpu.memory_space<vmem>>, vector<1x8x128xf32>
      %63 = vector.shape_cast %62 : vector<1x8x128xf32> to vector<8x128xf32>
      %64 = vector.shape_cast %36 : vector<16x128xf32> to vector<2x8x128xf32>
      %cst_30 = arith.constant dense<0.000000e+00> : vector<8x128xf32>
      %65 = vector.multi_reduction <add>, %64, %cst_30 [0] : vector<2x8x128xf32> to vector<8x128xf32>
      %66 = arith.addf %63, %65 : vector<8x128xf32>
      %c2_31 = arith.constant 2 : index
      %c0_32 = arith.constant 0 : index
      %c0_33 = arith.constant 0 : index
      %67 = vector.load %arg4[%c2_31, %c0_32, %c0_33] : memref<4x8x128xf32, #tpu.memory_space<vmem>>, vector<1x8x128xf32>
      %68 = vector.shape_cast %67 : vector<1x8x128xf32> to vector<8x128xf32>
      %69 = vector.shape_cast %66 : vector<8x128xf32> to vector<1x8x128xf32>
      tpu.vector_store %arg4[%c2_31, %c0_32, %c0_33], %69 {strides = array<i32>} : memref<4x8x128xf32, #tpu.memory_space<vmem>>, vector<1x8x128xf32>,
      %c3 = arith.constant 3 : index
      %c0_34 = arith.constant 0 : index
      %c0_35 = arith.constant 0 : index
      %70 = vector.load %arg4[%c3, %c0_34, %c0_35] : memref<4x8x128xf32, #tpu.memory_space<vmem>>, vector<1x8x128xf32>
      %71 = vector.shape_cast %70 : vector<1x8x128xf32> to vector<8x128xf32>
      %72 = vector.shape_cast %16 : vector<16x128xf32> to vector<2x8x128xf32>
      %cst_36 = arith.constant dense<0.000000e+00> : vector<8x128xf32>
      %73 = vector.multi_reduction <add>, %72, %cst_36 [0] : vector<2x8x128xf32> to vector<8x128xf32>
      %74 = arith.addf %71, %73 : vector<8x128xf32>
      %c3_37 = arith.constant 3 : index
      %c0_38 = arith.constant 0 : index
      %c0_39 = arith.constant 0 : index
      %75 = vector.load %arg4[%c3_37, %c0_38, %c0_39] : memref<4x8x128xf32, #tpu.memory_space<vmem>>, vector<1x8x128xf32>
      %76 = vector.shape_cast %75 : vector<1x8x128xf32> to vector<8x128xf32>
      %77 = vector.shape_cast %74 : vector<8x128xf32> to vector<1x8x128xf32>
      tpu.vector_store %arg4[%c3_37, %c0_38, %c0_39], %77 {strides = array<i32>} : memref<4x8x128xf32, #tpu.memory_space<vmem>>, vector<1x8x128xf32>,
    } else {
    }
    %13 = arith.extui %10 : i1 to i32
    %c0_i32_5 = arith.constant 0 : i32
    %14 = arith.cmpi ne, %13, %c0_i32_5 : i32
    scf.if %14 {
      %15 = tpu.iota {dimensions = array<i32: 0>} : vector<16x128xi32>
      %16 = tpu.iota {dimensions = array<i32: 1>} : vector<16x128xi32>
      %17 = vector.broadcast %5 : i32 to vector<16x128xi32>
      %18 = arith.addi %17, %15 : vector<16x128xi32>
      %c16_i32_6 = arith.constant 16 : i32
      %19 = vector.broadcast %c16_i32_6 : i32 to vector<16x128xi32>
      %20 = arith.cmpi slt, %18, %19 : vector<16x128xi32>
      %c16_i32_7 = arith.constant 16 : i32
      %21 = vector.broadcast %c16_i32_7 : i32 to vector<16x128xi32>
      %22 = arith.cmpi eq, %18, %21 : vector<16x128xi32>
      %c0_i32_8 = arith.constant 0 : i32
      %23 = vector.broadcast %c0_i32_8 : i32 to vector<16x128xi32>
      %24 = arith.cmpi slt, %16, %23 : vector<16x128xi32>
      %25 = arith.andi %22, %24 : vector<16x128xi1>
      %26 = arith.ori %20, %25 : vector<16x128xi1>
      %c0 = arith.constant 0 : index
      %c0_9 = arith.constant 0 : index
      %27 = vector.load %arg2[%c0, %c0_9] : memref<16x128xf32, #tpu.memory_space<vmem>>, vector<16x128xf32>
      %c0_10 = arith.constant 0 : index
      %c0_11 = arith.constant 0 : index
      %28 = vector.load %arg3[%c0_10, %c0_11] : memref<16x128xf32, #tpu.memory_space<vmem>>, vector<16x128xf32>
      %29 = math.absf %27 : vector<16x128xf32>
      %cst = arith.constant 0.000000e+00 : f32
      %30 = vector.broadcast %cst : f32 to vector<16x128xf32>
      %31 = arith.subf %30, %29 : vector<16x128xf32>
      %32 = math.exp %31 : vector<16x128xf32>
      %cst_12 = arith.constant 0.000000e+00 : f32
      %33 = vector.broadcast %cst_12 : f32 to vector<16x128xf32>
      %34 = arith.subf %33, %27 : vector<16x128xf32>
      %cst_13 = arith.constant 0.000000e+00 : f32
      %35 = vector.broadcast %cst_13 : f32 to vector<16x128xf32>
      %36 = arith.maximumf %34, %35 : vector<16x128xf32>
      %37 = math.log1p %32 : vector<16x128xf32>
      %38 = arith.addf %36, %37 : vector<16x128xf32>
      %39 = arith.mulf %27, %28 : vector<16x128xf32>
      %40 = arith.subf %27, %39 : vector<16x128xf32>
      %41 = arith.addf %40, %38 : vector<16x128xf32>
      %cst_14 = arith.constant 1.000000e+00 : f32
      %42 = vector.broadcast %cst_14 : f32 to vector<16x128xf32>
      %43 = arith.addf %42, %32 : vector<16x128xf32>
      %44 = tpu.reciprocal %43 : vector<16x128xf32> -> vector<16x128xf32>
      %cst_15 = arith.constant 0.000000e+00 : f32
      %45 = vector.broadcast %cst_15 : f32 to vector<16x128xf32>
      %46 = arith.cmpf oge, %27, %45 : vector<16x128xf32>
      %47 = arith.mulf %32, %44 : vector<16x128xf32>
      %48 = arith.select %46, %44, %47 : vector<16x128xi1>, vector<16x128xf32>
      %cst_16 = arith.constant 2.000000e+00 : f32
      %49 = vector.broadcast %cst_16 : f32 to vector<16x128xf32>
      %50 = arith.mulf %49, %48 : vector<16x128xf32>
      %cst_17 = arith.constant 1.000000e+00 : f32
      %51 = vector.broadcast %cst_17 : f32 to vector<16x128xf32>
      %52 = arith.subf %51, %50 : vector<16x128xf32>
      %53 = arith.mulf %28, %52 : vector<16x128xf32>
      %54 = arith.addf %48, %53 : vector<16x128xf32>
      %55 = arith.mulf %54, %54 : vector<16x128xf32>
      %56 = arith.mulf %55, %41 : vector<16x128xf32>
      %57 = arith.mulf %48, %28 : vector<16x128xf32>
      %cst_18 = arith.constant 0.000000e+00 : f32
      %58 = vector.broadcast %cst_18 : f32 to vector<16x128xf32>
      %59 = arith.select %26, %56, %58 : vector<16x128xi1>, vector<16x128xf32>
      %cst_19 = arith.constant 0.000000e+00 : f32
      %60 = vector.broadcast %cst_19 : f32 to vector<16x128xf32>
      %61 = arith.select %26, %57, %60 : vector<16x128xi1>, vector<16x128xf32>
      %cst_20 = arith.constant 0.000000e+00 : f32
      %62 = vector.broadcast %cst_20 : f32 to vector<16x128xf32>
      %63 = arith.select %26, %48, %62 : vector<16x128xi1>, vector<16x128xf32>
      %cst_21 = arith.constant 0.000000e+00 : f32
      %64 = vector.broadcast %cst_21 : f32 to vector<16x128xf32>
      %65 = arith.select %26, %28, %64 : vector<16x128xi1>, vector<16x128xf32>
      %c0_22 = arith.constant 0 : index
      %c0_23 = arith.constant 0 : index
      %c0_24 = arith.constant 0 : index
      %66 = vector.load %arg4[%c0_22, %c0_23, %c0_24] : memref<4x8x128xf32, #tpu.memory_space<vmem>>, vector<1x8x128xf32>
      %67 = vector.shape_cast %66 : vector<1x8x128xf32> to vector<8x128xf32>
      %68 = vector.shape_cast %59 : vector<16x128xf32> to vector<2x8x128xf32>
      %cst_25 = arith.constant dense<0.000000e+00> : vector<8x128xf32>
      %69 = vector.multi_reduction <add>, %68, %cst_25 [0] : vector<2x8x128xf32> to vector<8x128xf32>
      %70 = arith.addf %67, %69 : vector<8x128xf32>
      %c0_26 = arith.constant 0 : index
      %c0_27 = arith.constant 0 : index
      %c0_28 = arith.constant 0 : index
      %71 = vector.load %arg4[%c0_26, %c0_27, %c0_28] : memref<4x8x128xf32, #tpu.memory_space<vmem>>, vector<1x8x128xf32>
      %72 = vector.shape_cast %71 : vector<1x8x128xf32> to vector<8x128xf32>
      %73 = vector.shape_cast %70 : vector<8x128xf32> to vector<1x8x128xf32>
      tpu.vector_store %arg4[%c0_26, %c0_27, %c0_28], %73 {strides = array<i32>} : memref<4x8x128xf32, #tpu.memory_space<vmem>>, vector<1x8x128xf32>,
      %c1 = arith.constant 1 : index
      %c0_29 = arith.constant 0 : index
      %c0_30 = arith.constant 0 : index
      %74 = vector.load %arg4[%c1, %c0_29, %c0_30] : memref<4x8x128xf32, #tpu.memory_space<vmem>>, vector<1x8x128xf32>
      %75 = vector.shape_cast %74 : vector<1x8x128xf32> to vector<8x128xf32>
      %76 = vector.shape_cast %61 : vector<16x128xf32> to vector<2x8x128xf32>
      %cst_31 = arith.constant dense<0.000000e+00> : vector<8x128xf32>
      %77 = vector.multi_reduction <add>, %76, %cst_31 [0] : vector<2x8x128xf32> to vector<8x128xf32>
      %78 = arith.addf %75, %77 : vector<8x128xf32>
      %c1_32 = arith.constant 1 : index
      %c0_33 = arith.constant 0 : index
      %c0_34 = arith.constant 0 : index
      %79 = vector.load %arg4[%c1_32, %c0_33, %c0_34] : memref<4x8x128xf32, #tpu.memory_space<vmem>>, vector<1x8x128xf32>
      %80 = vector.shape_cast %79 : vector<1x8x128xf32> to vector<8x128xf32>
      %81 = vector.shape_cast %78 : vector<8x128xf32> to vector<1x8x128xf32>
      tpu.vector_store %arg4[%c1_32, %c0_33, %c0_34], %81 {strides = array<i32>} : memref<4x8x128xf32, #tpu.memory_space<vmem>>, vector<1x8x128xf32>,
      %c2 = arith.constant 2 : index
      %c0_35 = arith.constant 0 : index
      %c0_36 = arith.constant 0 : index
      %82 = vector.load %arg4[%c2, %c0_35, %c0_36] : memref<4x8x128xf32, #tpu.memory_space<vmem>>, vector<1x8x128xf32>
      %83 = vector.shape_cast %82 : vector<1x8x128xf32> to vector<8x128xf32>
      %84 = vector.shape_cast %63 : vector<16x128xf32> to vector<2x8x128xf32>
      %cst_37 = arith.constant dense<0.000000e+00> : vector<8x128xf32>
      %85 = vector.multi_reduction <add>, %84, %cst_37 [0] : vector<2x8x128xf32> to vector<8x128xf32>
      %86 = arith.addf %83, %85 : vector<8x128xf32>
      %c2_38 = arith.constant 2 : index
      %c0_39 = arith.constant 0 : index
      %c0_40 = arith.constant 0 : index
      %87 = vector.load %arg4[%c2_38, %c0_39, %c0_40] : memref<4x8x128xf32, #tpu.memory_space<vmem>>, vector<1x8x128xf32>
      %88 = vector.shape_cast %87 : vector<1x8x128xf32> to vector<8x128xf32>
      %89 = vector.shape_cast %86 : vector<8x128xf32> to vector<1x8x128xf32>
      tpu.vector_store %arg4[%c2_38, %c0_39, %c0_40], %89 {strides = array<i32>} : memref<4x8x128xf32, #tpu.memory_space<vmem>>, vector<1x8x128xf32>,
      %c3 = arith.constant 3 : index
      %c0_41 = arith.constant 0 : index
      %c0_42 = arith.constant 0 : index
      %90 = vector.load %arg4[%c3, %c0_41, %c0_42] : memref<4x8x128xf32, #tpu.memory_space<vmem>>, vector<1x8x128xf32>
      %91 = vector.shape_cast %90 : vector<1x8x128xf32> to vector<8x128xf32>
      %92 = vector.shape_cast %65 : vector<16x128xf32> to vector<2x8x128xf32>
      %cst_43 = arith.constant dense<0.000000e+00> : vector<8x128xf32>
      %93 = vector.multi_reduction <add>, %92, %cst_43 [0] : vector<2x8x128xf32> to vector<8x128xf32>
      %94 = arith.addf %91, %93 : vector<8x128xf32>
      %c3_44 = arith.constant 3 : index
      %c0_45 = arith.constant 0 : index
      %c0_46 = arith.constant 0 : index
      %95 = vector.load %arg4[%c3_44, %c0_45, %c0_46] : memref<4x8x128xf32, #tpu.memory_space<vmem>>, vector<1x8x128xf32>
      %96 = vector.shape_cast %95 : vector<1x8x128xf32> to vector<8x128xf32>
      %97 = vector.shape_cast %94 : vector<8x128xf32> to vector<1x8x128xf32>
      tpu.vector_store %arg4[%c3_44, %c0_45, %c0_46], %97 {strides = array<i32>} : memref<4x8x128xf32, #tpu.memory_space<vmem>>, vector<1x8x128xf32>,
    } else {
    }
    return
  }
  func.func @transform_0(%arg0: i32, %arg1: i32) -> (i32, i32) {
    %c1_i32 = arith.constant 1 : i32
    %0 = arith.muli %arg0, %c1_i32 : i32
    %1 = arith.addi %0, %arg1 : i32
    %c0_i32 = arith.constant 0 : i32
    %2 = arith.minsi %1, %c0_i32 : i32
    %c0_i32_0 = arith.constant 0 : i32
    %c0_i32_1 = arith.constant 0 : i32
    return %2, %c0_i32_0 : i32, i32
  }
  func.func @transform_1(%arg0: i32, %arg1: i32) -> (i32, i32) {
    %c1_i32 = arith.constant 1 : i32
    %0 = arith.muli %arg0, %c1_i32 : i32
    %1 = arith.addi %0, %arg1 : i32
    %c0_i32 = arith.constant 0 : i32
    %2 = arith.minsi %1, %c0_i32 : i32
    %c0_i32_0 = arith.constant 0 : i32
    %c0_i32_1 = arith.constant 0 : i32
    return %2, %c0_i32_0 : i32, i32
  }
  func.func @transform_2(%arg0: i32, %arg1: i32) -> (i32, i32, i32) {
    %c0_i32 = arith.constant 0 : i32
    %c0_i32_0 = arith.constant 0 : i32
    %c0_i32_1 = arith.constant 0 : i32
    return %arg0, %c0_i32, %c0_i32_0 : i32, i32, i32
  }
}

</mosaic_0001>

<llo_original>
// kernel: tpu_custom_call.1
$region0: #{tpu_custom_call.1}
  #allocation0 [shape = 'u32[]', space=smem, size = 0x4, offset = 0x4, fixed_abs, tag = 'smem constant byte address 0x4 - core index']
  #allocation1 [shape = 'u32[144,128]{1,0:T(1,128)}', space=vmem, size = 0x12000, scoped, tag = 'internal scratch']
  %s0 = inlined_call_operand.hbm [shape: f32[16,128], index: 0, kind: input, shape index: {}]
  %s1 = inlined_call_operand.hbm [shape: f32[16,128], index: 1, kind: input, shape index: {}]
  %s2 = inlined_call_operand.hbm [shape: f32[4,8,128], index: 2, kind: output, shape index: {}]
  %s3 = sld [smem:[#allocation0]]
  $region38: #{tpu_custom_call.1} parent=0
    _
  %s5 = ssub.s32 1, %s3
  %s6 = scalar_select 0, %s5, %s3
  $region1: #{tpu_custom_call.1} parent=0
    #allocation2 [shape = 'u8[8192]{0}', space=vmem, size = 0x2000, scoped, tag = 'input window, operand 0, single buffered']
    #allocation3 [shape = 's32[1]{0}', space=sflag, size = 0x4, scoped, tag = 'scoped memory for tpu_custom_call.1']
    #allocation4 [shape = 's32[1]{0}', space=sflag, size = 0x4, scoped, tag = 'scoped memory for tpu_custom_call.1']
    #allocation5 [shape = 'u8[8192]{0}', space=vmem, size = 0x2000, scoped, tag = 'input window, operand 1, single buffered']
    #allocation6 [shape = 's32[1]{0}', space=sflag, size = 0x4, scoped, tag = 'scoped memory for tpu_custom_call.1']
    #allocation7 [shape = 'u8[16384]{0}', space=vmem, size = 0x4000, scoped, tag = 'output window, operand 0, single buffered']
    %7 = vsyncpa [#allocation3], 0
    %8 = vsyncpa [#allocation6], 0
    %9 = vsyncpa [#allocation4], 0
    // Predicated region
    $region2: #{tpu_custom_call.1} parent=1 // pred_check
      _
    $region3: #{tpu_custom_call.1} parent=1 // pred_check_branch
      %11 = sbr.rel (0) target = $region5
    $region4: #{tpu_custom_call.1} parent=1 // pred_region
      %s12 = sadd.s32 0, 0
      %p13 = scmp.lt.s32.totalorder %s12, 0
      %s14 = scalar_select %p13, %s12, 0
      %s15 = smul.u32 2, %s14
      %s17 = ssub.s32 256, 256
      %18 = vsyncadd [#allocation3], %s17
      %s19 = smul.addr %s15, 128
      %s20 = scalar_lea.hbm %s0, %s19
      %s21 = sshll.u32 [#allocation2], 4
      %s22 = int_to_ptr.vmem [resolvable:$true] %s21
      %27 = dma.hbm_to_vmem [thread:$0]  %s20, 256, %s22, [#allocation3], 128, 128, 8
    $region5: #{tpu_custom_call.1} parent=1 // pred_fallthru
      _
    // Predicated region
    $region6: #{tpu_custom_call.1} parent=1 // pred_check
      _
    $region7: #{tpu_custom_call.1} parent=1 // pred_check_branch
      %29 = sbr.rel (0) target = $region9
    $region8: #{tpu_custom_call.1} parent=1 // pred_region
      %s30 = sadd.s32 0, 0
      %p31 = scmp.lt.s32.totalorder %s30, 0
      %s32 = scalar_select %p31, %s30, 0
      %s33 = smul.u32 2, %s32
      %s35 = ssub.s32 256, 256
      %36 = vsyncadd [#allocation6], %s35
      %s37 = smul.addr %s33, 128
      %s38 = scalar_lea.hbm %s1, %s37
      %s39 = sshll.u32 [#allocation5], 4
      %s40 = int_to_ptr.vmem [resolvable:$true] %s39
      %45 = dma.hbm_to_vmem [thread:$0]  %s38, 256, %s40, [#allocation6], 128, 128, 8
    $region9: #{tpu_custom_call.1} parent=1 // pred_fallthru
      _
    // Predicated region
    $region10: #{tpu_custom_call.1} parent=1 // pred_check
      _
    $region11: #{tpu_custom_call.1} parent=1 // pred_check_branch
      %47 = sbr.rel (0) target = $region13
    $region12: #{tpu_custom_call.1} parent=1 // pred_region
      %48 = dma.done [#allocation3], 256
    $region13: #{tpu_custom_call.1} parent=1 // pred_fallthru
      _
    // Predicated region
    $region14: #{tpu_custom_call.1} parent=1 // pred_check
      _
    $region15: #{tpu_custom_call.1} parent=1 // pred_check_branch
      %50 = sbr.rel (0) target = $region17
    $region16: #{tpu_custom_call.1} parent=1 // pred_region
      %51 = dma.done [#allocation6], 256
    $region17: #{tpu_custom_call.1} parent=1 // pred_fallthru
      _
    %s52 = sadd.s32 0, 0
    %p53 = scmp.lt.s32.totalorder %s52, 0
    %s54 = scalar_select %p53, %s52, 0
    %s55 = smul.u32 2, %s54
    %s56 = sadd.s32 0, 0
    %p57 = scmp.lt.s32.totalorder %s56, 0
    %s58 = scalar_select %p57, %s56, 0
    %s59 = smul.u32 2, %s58
    %p60 = scmp.eq.s32.totalorder 0, 0
    // Predicated region
    $region18: #{tpu_custom_call.1} parent=1 // pred_check
      %p61 = pneg %p60
    $region19: #{tpu_custom_call.1} parent=1 // pred_check_branch
      %63 = sbr.rel (%p61) target = $region21
    $region20: #{tpu_custom_call.1} parent=1 // pred_region
      %64 = vst [vmem:[#allocation7] sm:$0xff] 0.0
      %65 = vst [vmem:[#allocation7 + $0x8] sm:$0xff] 0.0
      %66 = vst [vmem:[#allocation7 + $0x10] sm:$0xff] 0.0
      %67 = vst [vmem:[#allocation7 + $0x18] sm:$0xff] 0.0
    $region21: #{tpu_custom_call.1} parent=1 // pred_fallthru
      _
    %s68 = sadd.s32 0, 0
    %s69 = smul.u32 %s68, 16
    %s70 = sadd.s32 %s69, 16
    %p71 = scmp.le.s32.totalorder %s70, 16
    %p72 = scmp.lt.s32.totalorder %s69, 16
    %p73 = scmp.gt.s32.totalorder %s70, 16
    %p74 = pnand %p72, %p73
    %p75 = pneg %p74
    // Predicated region
    $region22: #{tpu_custom_call.1} parent=1 // pred_check
      %p76 = pneg %p71
    $region23: #{tpu_custom_call.1} parent=1 // pred_check_branch
      %78 = sbr.rel (%p76) target = $region25
    $region24: #{tpu_custom_call.1} parent=1 // pred_region
      %v79 = vld [vmem:[#allocation2] sm:$0xff]
      %v80 = vld [vmem:[#allocation2 + $0x8] sm:$0xff]
      %v81 = vld [vmem:[#allocation5] sm:$0xff]
      %v82 = vld [vmem:[#allocation5 + $0x8] sm:$0xff]
      %v83 = vand.u32 2147483647, %v79
      %v84 = vand.u32 2147483647, %v80
      %v85 = vsub.f32 0.0, %v83
      %v86 = vsub.f32 0.0, %v84
      %v87 = vmul.f32 %v85, 1.442695
      %v88 = vpow.pop %v87
      %v89 = vmul.f32 %v86, 1.442695
      %v90 = vpow.pop %v89
      %v91 = vsub.f32 0.0, %v79
      %v92 = vsub.f32 0.0, %v80
      %v93 = vmax.f32 %v91, 0.0
      %v94 = vmax.f32 %v92, 0.0
      %v95 = vadd.f32 %v88, 1.0
      %v96 = vlog2.pop %v95
      %v97 = vmul.f32 %v96, 0.6931472
      %v98 = vmul.f32 -0.5, %v88
      %v99 = vadd.f32 %v98, 1.0
      %v100 = vmul.f32 %v99, %v88
      %v101 = vand.u32 2147483647, %v88
      %vm102 = vcmp.lt.f32.partialorder %v101, 0.0004427343
      %v103 = vsel %vm102, %v100, %v97
      %v104 = vadd.f32 %v90, 1.0
      %v105 = vlog2.pop %v104
      %v106 = vmul.f32 %v105, 0.6931472
      %v107 = vmul.f32 -0.5, %v90
      %v108 = vadd.f32 %v107, 1.0
      %v109 = vmul.f32 %v108, %v90
      %v110 = vand.u32 2147483647, %v90
      %vm111 = vcmp.lt.f32.partialorder %v110, 0.0004427343
      %v112 = vsel %vm111, %v109, %v106
      %v113 = vadd.f32 %v93, %v103
      %v114 = vadd.f32 %v94, %v112
      %v115 = vmul.f32 %v79, %v81
      %v116 = vmul.f32 %v80, %v82
      %v117 = vsub.f32 %v79, %v115
      %v118 = vsub.f32 %v80, %v116
      %v119 = vadd.f32 %v117, %v113
      %v120 = vadd.f32 %v118, %v114
      %v121 = vadd.f32 %v88, 1.0
      %v122 = vadd.f32 %v90, 1.0
      %v123 = vrcp.pop %v121
      %v124 = vrcp.pop %v122
      %vm125 = vcmp.ge.f32.partialorder %v79, 0.0
      %vm126 = vcmp.ge.f32.partialorder %v80, 0.0
      %v127 = vmul.f32 %v88, %v123
      %v128 = vmul.f32 %v90, %v124
      %v129 = vsel %vm125, %v123, %v127
      %v130 = vsel %vm126, %v124, %v128
      %v131 = vmul.f32 %v129, 2.0
      %v132 = vmul.f32 %v130, 2.0
      %v133 = vsub.f32 1.0, %v131
      %v134 = vsub.f32 1.0, %v132
      %v135 = vmul.f32 %v81, %v133
      %v136 = vmul.f32 %v82, %v134
      %v137 = vadd.f32 %v129, %v135
      %v138 = vadd.f32 %v130, %v136
      %v139 = vmul.f32 %v137, %v137
      %v140 = vmul.f32 %v138, %v138
      %v141 = vmul.f32 %v139, %v119
      %v142 = vmul.f32 %v140, %v120
      %v143 = vmul.f32 %v129, %v81
      %v144 = vmul.f32 %v130, %v82
      %v145 = vld [vmem:[#allocation7] sm:$0xff]
      %v146 = vadd.f32 %v141, %v142
      %v147 = vadd.f32 %v145, %v146
      %148 = vst [vmem:[#allocation7] sm:$0xff] %v147
      %s149 = scalar_lea.vmem [#allocation7], 8
      %v150 = vld [vmem:[%s149] sm:$0xff]
      %v151 = vadd.f32 %v143, %v144
      %v152 = vadd.f32 %v150, %v151
      %153 = vst [vmem:[%s149] sm:$0xff] %v152
      %s154 = scalar_lea.vmem [#allocation7], 16
      %v155 = vld [vmem:[%s154] sm:$0xff]
      %v156 = vadd.f32 %v129, %v130
      %v157 = vadd.f32 %v155, %v156
      %158 = vst [vmem:[%s154] sm:$0xff] %v157
      %s159 = scalar_lea.vmem [#allocation7], 24
      %v160 = vld [vmem:[%s159] sm:$0xff]
      %v161 = vadd.f32 %v81, %v82
      %v162 = vadd.f32 %v160, %v161
      %163 = vst [vmem:[%s159] sm:$0xff] %v162
    $region25: #{tpu_custom_call.1} parent=1 // pred_fallthru
      _
    // Predicated region
    $region26: #{tpu_custom_call.1} parent=1 // pred_check
      _
    $region27: #{tpu_custom_call.1} parent=1 // pred_check_branch
      %165 = sbr.rel (%p74) target = $region29
    $region28: #{tpu_custom_call.1} parent=1 // pred_region
      %v166 = vlaneseq
      %v167 = vshrl.u32 %v166, 7
      %v168 = vadd.s32 %v167, 8
      %v169 = vlaneseq
      %v170 = vand.u32 %v169, 127
      %v171 = vstv %s69
      %v172 = vadd.s32 %v171, %v167
      %v173 = vadd.s32 %v171, %v168
      %vm174 = vcmp.lt.s32.totalorder %v172, 16
      %vm175 = vcmp.lt.s32.totalorder %v173, 16
      %vm176 = vcmp.eq.s32.totalorder %v172, 16
      %vm177 = vcmp.eq.s32.totalorder %v173, 16
      %vm178 = vcmp.lt.s32.totalorder %v170, 0
      %vm179 = vmand %vm176, %vm178
      %vm180 = vmand %vm177, %vm178
      %vm181 = vmor %vm174, %vm179
      %vm182 = vmor %vm175, %vm180
      %v183 = vld [vmem:[#allocation2] sm:$0xff]
      %v184 = vld [vmem:[#allocation2 + $0x8] sm:$0xff]
      %v185 = vld [vmem:[#allocation5] sm:$0xff]
      %v186 = vld [vmem:[#allocation5 + $0x8] sm:$0xff]
      %v187 = vand.u32 2147483647, %v183
      %v188 = vand.u32 2147483647, %v184
      %v189 = vsub.f32 0.0, %v187
      %v190 = vsub.f32 0.0, %v188
      %v191 = vmul.f32 %v189, 1.442695
      %v192 = vpow.pop %v191
      %v193 = vmul.f32 %v190, 1.442695
      %v194 = vpow.pop %v193
      %v195 = vsub.f32 0.0, %v183
      %v196 = vsub.f32 0.0, %v184
      %v197 = vmax.f32 %v195, 0.0
      %v198 = vmax.f32 %v196, 0.0
      %v199 = vadd.f32 %v192, 1.0
      %v200 = vlog2.pop %v199
      %v201 = vmul.f32 %v200, 0.6931472
      %v202 = vmul.f32 -0.5, %v192
      %v203 = vadd.f32 %v202, 1.0
      %v204 = vmul.f32 %v203, %v192
      %v205 = vand.u32 2147483647, %v192
      %vm206 = vcmp.lt.f32.partialorder %v205, 0.0004427343
      %v207 = vsel %vm206, %v204, %v201
      %v208 = vadd.f32 %v194, 1.0
      %v209 = vlog2.pop %v208
      %v210 = vmul.f32 %v209, 0.6931472
      %v211 = vmul.f32 -0.5, %v194
      %v212 = vadd.f32 %v211, 1.0
      %v213 = vmul.f32 %v212, %v194
      %v214 = vand.u32 2147483647, %v194
      %vm215 = vcmp.lt.f32.partialorder %v214, 0.0004427343
      %v216 = vsel %vm215, %v213, %v210
      %v217 = vadd.f32 %v197, %v207
      %v218 = vadd.f32 %v198, %v216
      %v219 = vmul.f32 %v183, %v185
      %v220 = vmul.f32 %v184, %v186
      %v221 = vsub.f32 %v183, %v219
      %v222 = vsub.f32 %v184, %v220
      %v223 = vadd.f32 %v221, %v217
      %v224 = vadd.f32 %v222, %v218
      %v225 = vadd.f32 %v192, 1.0
      %v226 = vadd.f32 %v194, 1.0
      %v227 = vrcp.pop %v225
      %v228 = vrcp.pop %v226
      %vm229 = vcmp.ge.f32.partialorder %v183, 0.0
      %vm230 = vcmp.ge.f32.partialorder %v184, 0.0
      %v231 = vmul.f32 %v192, %v227
      %v232 = vmul.f32 %v194, %v228
      %v233 = vsel %vm229, %v227, %v231
      %v234 = vsel %vm230, %v228, %v232
      %v235 = vmul.f32 %v233, 2.0
      %v236 = vmul.f32 %v234, 2.0
      %v237 = vsub.f32 1.0, %v235
      %v238 = vsub.f32 1.0, %v236
      %v239 = vmul.f32 %v185, %v237
      %v240 = vmul.f32 %v186, %v238
      %v241 = vadd.f32 %v233, %v239
      %v242 = vadd.f32 %v234, %v240
      %v243 = vmul.f32 %v241, %v241
      %v244 = vmul.f32 %v242, %v242
      %v245 = vmul.f32 %v243, %v223
      %v246 = vmul.f32 %v244, %v224
      %v247 = vmul.f32 %v233, %v185
      %v248 = vmul.f32 %v234, %v186
      %v249 = vsel %vm181, %v245, 0.0
      %v250 = vsel %vm182, %v246, 0.0
      %v251 = vsel %vm181, %v247, 0.0
      %v252 = vsel %vm182, %v248, 0.0
      %v253 = vsel %vm181, %v233, 0.0
      %v254 = vsel %vm182, %v234, 0.0
      %v255 = vsel %vm181, %v185, 0.0
      %v256 = vsel %vm182, %v186, 0.0
      %v257 = vld [vmem:[#allocation7] sm:$0xff]
      %v258 = vadd.f32 %v249, %v250
      %v259 = vadd.f32 %v257, %v258
      %260 = vst [vmem:[#allocation7] sm:$0xff] %v259
      %s261 = scalar_lea.vmem [#allocation7], 8
      %v262 = vld [vmem:[%s261] sm:$0xff]
      %v263 = vadd.f32 %v251, %v252
      %v264 = vadd.f32 %v262, %v263
      %265 = vst [vmem:[%s261] sm:$0xff] %v264
      %s266 = scalar_lea.vmem [#allocation7], 16
      %v267 = vld [vmem:[%s266] sm:$0xff]
      %v268 = vadd.f32 %v253, %v254
      %v269 = vadd.f32 %v267, %v268
      %270 = vst [vmem:[%s266] sm:$0xff] %v269
      %s271 = scalar_lea.vmem [#allocation7], 24
      %v272 = vld [vmem:[%s271] sm:$0xff]
      %v273 = vadd.f32 %v255, %v256
      %v274 = vadd.f32 %v272, %v273
      %275 = vst [vmem:[%s271] sm:$0xff] %v274
    $region29: #{tpu_custom_call.1} parent=1 // pred_fallthru
      _
    // Predicated region
    $region30: #{tpu_custom_call.1} parent=1 // pred_check
      _
    $region31: #{tpu_custom_call.1} parent=1 // pred_check_branch
      %277 = sbr.rel (0) target = $region33
    $region32: #{tpu_custom_call.1} parent=1 // pred_region
      %s279 = ssub.s32 512, 512
      %280 = vsyncadd [#allocation4], %s279
      %s281 = sshll.u32 [#allocation7], 4
      %s282 = int_to_ptr.vmem [resolvable:$true] %s281
      %287 = dma.vmem_to_hbm [thread:$0]  %s282, 512, %s2, [#allocation4], 128, 128, 8
    $region33: #{tpu_custom_call.1} parent=1 // pred_fallthru
      _
    // Predicated region
    $region34: #{tpu_custom_call.1} parent=1 // pred_check
      _
    $region35: #{tpu_custom_call.1} parent=1 // pred_check_branch
      %289 = sbr.rel (0) target = $region37
    $region36: #{tpu_custom_call.1} parent=1 // pred_region
      %290 = dma.done [#allocation4], 512
    $region37: #{tpu_custom_call.1} parent=1 // pred_fallthru
      _
    %291 = vsyncpa [#allocation3], 1
    %292 = vsyncpa [#allocation6], 1
    %293 = vsyncpa [#allocation4], 1

</llo_original>
